<compile_context>
chip_gen: v7x
topology: tpu7x:2x2x1
jax: 0.10.0
libtpu: 0.0.40
codegen_flags: <defaults>
</compile_context>

<pallas_src>
import functools

import jax
import jax.numpy as jnp
from jax.experimental import pallas as pl
from jax.experimental.pallas import tpu as pltpu

HIDDEN = 32        # real hidden width of the MLP
HPAD = 128         # lane-padded width used inside the kernel
NEG_INF = -1e30    # pad value for fc3 bias -> padded softmax lanes become exactly 0


def _round_up(n, m):
    return ((n + m - 1) // m) * m


def _pick_batch_tile(batch, feat):
    """Pick the batch tile (rows per grid step)."""
    bpad8 = _round_up(batch, 8)
    if bpad8 <= 256:
        # Small batch: one step, latency-bound anyway.
        return bpad8
    # Per-step pipelined VMEM bytes per row:
    #   2 inputs x 2 buffers x feat x 4 B  +  output x 2 buffers x 128 x 4 B
    per_row = 2 * 2 * feat * 4 + 2 * HPAD * 4
    budget = 24 << 20                      # conservative: fits v7x scoped VMEM
    tb = min(2048, max(256, (budget // per_row) // 8 * 8))
    # Keep >= 2 grid steps so the "parallel" batch axis shards across both
    # TensorCores on v7x (a single huge tile would idle one core).
    half = _round_up(-(-bpad8 // 2), 8)
    return max(8, min(tb, half))


def _predict_net_2_kernel(x1_ref, x2_ref, w_ref, b_ref, o_ref):
    """One batch tile: fused concat + fc1 + sigmoid + fc2 + sigmoid + fc3 + softmax."""
    f = x1_ref.shape[1]
    hpad = o_ref.shape[1]          # = HPAD (128)

    # bf16 operands -> native MXU bf16 rate; f32 accumulation.
    x1 = x1_ref[...].astype(jnp.bfloat16)          # (TB, F)
    x2 = x2_ref[...].astype(jnp.bfloat16)          # (TB, F)

    # Packed bf16 weight slab layout (rows): [0:F) fc1 for x1, [F:2F) fc1 for
    # x2, [2F:2F+128) fc2, [2F+128:2F+256) fc3.  All static slices.
    w1a = w_ref[0:f, :]
    w1b = w_ref[f:2 * f, :]
    w2 = w_ref[2 * f:2 * f + hpad, :]
    w3 = w_ref[2 * f + hpad:2 * f + 2 * hpad, :]
    b1 = b_ref[0:1, :]                             # f32 biases
    b2 = b_ref[1:2, :]
    b3 = b_ref[2:3, :]

    # fc1 with the torch.cat fused in: [x1, x2] @ W1 == x1 @ W1[:F] + x2 @ W1[F:]
    h1 = (jnp.dot(x1, w1a, preferred_element_type=jnp.float32)
          + jnp.dot(x2, w1b, preferred_element_type=jnp.float32) + b1)
    h1 = 0.5 * jnp.tanh(0.5 * h1) + 0.5            # sigmoid, single EUP op

    h2 = jnp.dot(h1.astype(jnp.bfloat16), w2, preferred_element_type=jnp.float32) + b2
    h2 = 0.5 * jnp.tanh(0.5 * h2) + 0.5            # sigmoid

    # Logits: padded lanes get bias -1e30 -> exp(.) == 0 after the max-shift,
    # so the softmax over all 128 lanes equals the softmax over the real lanes.
    s = jnp.dot(h2.astype(jnp.bfloat16), w3, preferred_element_type=jnp.float32) + b3
    m = jnp.max(s, axis=-1, keepdims=True)
    e = jnp.exp(s - m)
    o_ref[...] = e * pl.reciprocal(jnp.sum(e, axis=-1, keepdims=True), approx=True)


@functools.partial(jax.jit, static_argnames=("action_dim",))
def predict_net_2_forward(x1, x2, packed_params, *, action_dim):
    """PredictNet_2 forward.

    x1/x2: (F,) (original single-sample semantics) or (B, F) (batched: the
    module applied independently per row).  Returns (action_dim,) or
    (B, action_dim) softmax probabilities (f32, matching the module).
    """
    w_packed, b_packed = packed_params

    squeeze = (x1.ndim == 1)
    if squeeze:
        x1, x2 = x1[None, :], x2[None, :]
    x1 = x1.astype(jnp.float32)    # matches PyTorch x.float()
    x2 = x2.astype(jnp.float32)
    batch, feat = x1.shape

    tb = _pick_batch_tile(batch, feat)
    bpad = _round_up(batch, tb)
    if bpad != batch:
        pad = ((0, bpad - batch), (0, 0))
        x1 = jnp.pad(x1, pad)
        x2 = jnp.pad(x2, pad)
    grid = bpad // tb

    w_bytes = int(w_packed.size) * w_packed.dtype.itemsize
    b_bytes = int(b_packed.size) * b_packed.dtype.itemsize
    # Per-step VMEM estimate (double-buffered inputs/output + weight slab).
    vmem_est = 2 * (2 * tb * feat * 4) + 2 * tb * HPAD * 4 + 2 * (w_bytes + b_bytes)
    vmem_limit = int(min(56 << 20, max(2 * vmem_est, 32 << 20)))

    flops = 2 * batch * (2 * feat * HIDDEN + HIDDEN * HIDDEN + HIDDEN * action_dim)
    transc = batch * 3 * HPAD
    bytes_acc = 4 * (2 * bpad * feat + bpad * HPAD) + grid * (w_bytes + b_bytes)

    out = pl.pallas_call(
        _predict_net_2_kernel,
        out_shape=jax.ShapeDtypeStruct((bpad, HPAD), jnp.float32),
        grid=(grid,),
        in_specs=[
            pl.BlockSpec((tb, feat), lambda i: (i, 0)),       # x1 batch tile
            pl.BlockSpec((tb, feat), lambda i: (i, 0)),       # x2 batch tile
            pl.BlockSpec(w_packed.shape, lambda i: (0, 0)),   # bf16 weights: VMEM-resident
            pl.BlockSpec(b_packed.shape, lambda i: (0, 0)),   # f32 biases: VMEM-resident
        ],
        out_specs=pl.BlockSpec((tb, HPAD), lambda i: (i, 0)),
        compiler_params=pltpu.CompilerParams(
            dimension_semantics=("parallel",),
            vmem_limit_bytes=vmem_limit),
        cost_estimate=pl.CostEstimate(
            flops=flops, transcendentals=transc, bytes_accessed=bytes_acc),
    )(x1, x2, w_packed, b_packed)

    out = out[:batch, :action_dim]   # drop batch padding + lane padding
    return out[0] if squeeze else out


def init_params(key, obs_feature_dim, action_dim):
    """nn.Linear-style init U(-1/sqrt(fan_in), 1/sqrt(fan_in)); W stored (in, out)."""
    def linear(k, fan_in, fan_out):
        kw, kb = jax.random.split(k)
        bound = 1.0 / jnp.sqrt(fan_in)
        w = jax.random.uniform(kw, (fan_in, fan_out), jnp.float32, -bound, bound)
        b = jax.random.uniform(kb, (fan_out,), jnp.float32, -bound, bound)
        return w, b

    k1, k2, k3 = jax.random.split(key, 3)
    w1, b1 = linear(k1, 2 * obs_feature_dim, HIDDEN)
    w2, b2 = linear(k2, HIDDEN, HIDDEN)
    w3, b3 = linear(k3, HIDDEN, action_dim)
    return (w1, b1, w2, b2, w3, b3)


def pack_params(params):
    """Pack (w1,b1,w2,b2,w3,b3) into one lane-padded bf16 weight slab + f32 bias slab.

    IMPORTANT coupling: rows HIDDEN..HPAD of the fc2/fc3 blocks MUST stay zero
    (padded hidden lanes carry sigmoid(0)=0.5 and must not contribute), and the
    bias slab must stay f32 so the -1e30 fc3 pad survives exactly.
    """
    w1, b1, w2, b2, w3, b3 = params
    two_f = w1.shape[0]
    action_dim = w3.shape[1]

    w1p = jnp.zeros((two_f, HPAD), jnp.float32).at[:, :HIDDEN].set(w1)
    w2p = jnp.zeros((HPAD, HPAD), jnp.float32).at[:HIDDEN, :HIDDEN].set(w2)
    w3p = jnp.zeros((HPAD, HPAD), jnp.float32).at[:HIDDEN, :action_dim].set(w3)
    # bf16 halves the dominant HBM transfer; zero padding is exact in bf16.
    w_packed = jnp.concatenate([w1p, w2p, w3p], axis=0).astype(jnp.bfloat16)

    b1p = jnp.zeros((HPAD,), jnp.float32).at[:HIDDEN].set(b1)
    b2p = jnp.zeros((HPAD,), jnp.float32).at[:HIDDEN].set(b2)
    b3p = jnp.full((HPAD,), NEG_INF, jnp.float32).at[:action_dim].set(b3)
    b_packed = jnp.stack([b1p, b2p, b3p], axis=0)              # (3, 128) f32
    return w_packed, b_packed


def reference_forward(x1, x2, params):
    """Pure-JAX f32 reference (per-row application of the PyTorch module)."""
    w1, b1, w2, b2, w3, b3 = params
    x = jnp.concatenate([x1, x2], axis=-1).astype(jnp.float32)
    h1 = jax.nn.sigmoid(x @ w1 + b1)
    h2 = jax.nn.sigmoid(h1 @ w2 + b2)
    return jax.nn.softmax(h2 @ w3 + b3, axis=-1)


if __name__ == "__main__":
    obs_feature_dim = 16
    action_dim = 4

    key = jax.random.PRNGKey(0)
    kp, kx1, kx2 = jax.random.split(key, 3)

    params = init_params(kp, obs_feature_dim, action_dim)
    packed = pack_params(params)

    # --- small batched path (tb == batch, single grid step) ---
    batch = 8
    x1 = jax.random.normal(kx1, (batch, obs_feature_dim), jnp.float32)
    x2 = jax.random.normal(kx2, (batch, obs_feature_dim), jnp.float32)

    out = predict_net_2_forward(x1, x2, packed, action_dim=action_dim)
    out = jax.block_until_ready(out)
    ref = reference_forward(x1, x2, params)

    # Tolerance: bf16 weights/activations in the dots + EUP approx reciprocal
    # in the softmax denominator -> observed deviation well under 1e-2.
    assert out.shape == (batch, action_dim), out.shape
    assert jnp.allclose(out, ref, atol=2e-2, rtol=2e-2), (out, ref)
    assert jnp.allclose(jnp.sum(out, axis=-1), 1.0, atol=2e-2)

    # --- larger batch: exercises multi-step grid (>=2 steps, v7x megacore)
    #     and the batch-padding path ---
    big = 600
    kx3, kx4 = jax.random.split(jax.random.PRNGKey(1))
    xb1 = jax.random.normal(kx3, (big, obs_feature_dim), jnp.float32)
    xb2 = jax.random.normal(kx4, (big, obs_feature_dim), jnp.float32)
    outb = predict_net_2_forward(xb1, xb2, packed, action_dim=action_dim)
    outb = jax.block_until_ready(outb)
    refb = reference_forward(xb1, xb2, params)
    assert outb.shape == (big, action_dim), outb.shape
    assert jnp.allclose(outb, refb, atol=2e-2, rtol=2e-2)

    # --- single-sample path (original module semantics: 1-D x1, x2) ---
    out1 = predict_net_2_forward(x1[0], x2[0], packed, action_dim=action_dim)
    out1 = jax.block_until_ready(out1)
    assert out1.shape == (action_dim,), out1.shape
    assert jnp.allclose(out1, ref[0], atol=2e-2, rtol=2e-2), (out1, ref[0])

    print("KERNEL_OK")
</pallas_src>

<mosaic_0001>
module attributes {stable_mosaic.version = 11 : i64} {
  func.func @_predict_net_2_kernel(%arg0: i32, %arg1: memref<8x16xf32, #tpu.memory_space<vmem>>, %arg2: memref<8x16xf32, #tpu.memory_space<vmem>>, %arg3: memref<288x128xbf16, #tpu.memory_space<vmem>>, %arg4: memref<3x128xf32, #tpu.memory_space<vmem>>, %arg5: memref<8x128xf32, #tpu.memory_space<vmem>>) attributes {dimension_semantics = [#tpu.dimension_semantics<parallel>], iteration_bounds = array<i64: 1>, scalar_prefetch = 0 : i64, scratch_operands = 0 : i64, tpu.core_type = #tpu.core_type<tc>, window_params = [{transform_indices = @transform_0, window_bounds = array<i64: 8, 16>}, {transform_indices = @transform_1, window_bounds = array<i64: 8, 16>}, {pipeline_mode = #tpu.pipeline_mode<synchronous>, transform_indices = @transform_2, window_bounds = array<i64: 288, 128>}, {pipeline_mode = #tpu.pipeline_mode<synchronous>, transform_indices = @transform_3, window_bounds = array<i64: 3, 128>}, {transform_indices = @transform_4, window_bounds = array<i64: 8, 128>}]} {
    %c0 = arith.constant 0 : index
    %c0_0 = arith.constant 0 : index
    %0 = vector.load %arg1[%c0, %c0_0] : memref<8x16xf32, #tpu.memory_space<vmem>>, vector<8x16xf32>
    %1 = arith.truncf %0 : vector<8x16xf32> to vector<8x16xbf16>
    %c0_1 = arith.constant 0 : index
    %c0_2 = arith.constant 0 : index
    %2 = vector.load %arg2[%c0_1, %c0_2] : memref<8x16xf32, #tpu.memory_space<vmem>>, vector<8x16xf32>
    %3 = arith.truncf %2 : vector<8x16xf32> to vector<8x16xbf16>
    %c0_3 = arith.constant 0 : index
    %c0_4 = arith.constant 0 : index
    %4 = vector.load %arg3[%c0_3, %c0_4] : memref<288x128xbf16, #tpu.memory_space<vmem>>, vector<16x128xbf16>
    %c16 = arith.constant 16 : index
    %c0_5 = arith.constant 0 : index
    %5 = vector.load %arg3[%c16, %c0_5] : memref<288x128xbf16, #tpu.memory_space<vmem>>, vector<16x128xbf16>
    %c32 = arith.constant 32 : index
    %c0_6 = arith.constant 0 : index
    %6 = vector.load %arg3[%c32, %c0_6] : memref<288x128xbf16, #tpu.memory_space<vmem>>, vector<128x128xbf16>
    %c160 = arith.constant 160 : index
    %c0_7 = arith.constant 0 : index
    %7 = vector.load %arg3[%c160, %c0_7] : memref<288x128xbf16, #tpu.memory_space<vmem>>, vector<128x128xbf16>
    %c0_8 = arith.constant 0 : index
    %c0_9 = arith.constant 0 : index
    %8 = vector.load %arg4[%c0_8, %c0_9] : memref<3x128xf32, #tpu.memory_space<vmem>>, vector<1x128xf32>
    %c1 = arith.constant 1 : index
    %c0_10 = arith.constant 0 : index
    %9 = vector.load %arg4[%c1, %c0_10] : memref<3x128xf32, #tpu.memory_space<vmem>>, vector<1x128xf32>
    %c2 = arith.constant 2 : index
    %c0_11 = arith.constant 0 : index
    %10 = vector.load %arg4[%c2, %c0_11] : memref<3x128xf32, #tpu.memory_space<vmem>>, vector<1x128xf32>
    %cst = arith.constant dense<0.000000e+00> : vector<8x128xf32>
    %11 = tpu.matmul %1, %4, %cst {dimension_numbers = #tpu.dot_dimension_numbers<[1], [0], [0], [1], [0, 0, 1, 1], [], []>} : vector<8x16xbf16>, vector<16x128xbf16>, vector<8x128xf32> -> vector<8x128xf32>
    %cst_12 = arith.constant dense<0.000000e+00> : vector<8x128xf32>
    %12 = tpu.matmul %3, %5, %cst_12 {dimension_numbers = #tpu.dot_dimension_numbers<[1], [0], [0], [1], [0, 0, 1, 1], [], []>} : vector<8x16xbf16>, vector<16x128xbf16>, vector<8x128xf32> -> vector<8x128xf32>
    %13 = arith.addf %11, %12 : vector<8x128xf32>
    %14 = vector.broadcast %8 : vector<1x128xf32> to vector<8x128xf32>
    %15 = arith.addf %13, %14 : vector<8x128xf32>
    %cst_13 = arith.constant 5.000000e-01 : f32
    %16 = vector.broadcast %cst_13 : f32 to vector<8x128xf32>
    %17 = arith.mulf %16, %15 : vector<8x128xf32>
    %18 = math.tanh %17 : vector<8x128xf32>
    %cst_14 = arith.constant 5.000000e-01 : f32
    %19 = vector.broadcast %cst_14 : f32 to vector<8x128xf32>
    %20 = arith.mulf %19, %18 : vector<8x128xf32>
    %cst_15 = arith.constant 5.000000e-01 : f32
    %21 = vector.broadcast %cst_15 : f32 to vector<8x128xf32>
    %22 = arith.addf %20, %21 : vector<8x128xf32>
    %23 = arith.truncf %22 : vector<8x128xf32> to vector<8x128xbf16>
    %cst_16 = arith.constant dense<0.000000e+00> : vector<8x128xf32>
    %24 = tpu.matmul %23, %6, %cst_16 {dimension_numbers = #tpu.dot_dimension_numbers<[1], [0], [0], [1], [0, 0, 1, 1], [], []>} : vector<8x128xbf16>, vector<128x128xbf16>, vector<8x128xf32> -> vector<8x128xf32>
    %25 = vector.broadcast %9 : vector<1x128xf32> to vector<8x128xf32>
    %26 = arith.addf %24, %25 : vector<8x128xf32>
    %cst_17 = arith.constant 5.000000e-01 : f32
    %27 = vector.broadcast %cst_17 : f32 to vector<8x128xf32>
    %28 = arith.mulf %27, %26 : vector<8x128xf32>
    %29 = math.tanh %28 : vector<8x128xf32>
    %cst_18 = arith.constant 5.000000e-01 : f32
    %30 = vector.broadcast %cst_18 : f32 to vector<8x128xf32>
    %31 = arith.mulf %30, %29 : vector<8x128xf32>
    %cst_19 = arith.constant 5.000000e-01 : f32
    %32 = vector.broadcast %cst_19 : f32 to vector<8x128xf32>
    %33 = arith.addf %31, %32 : vector<8x128xf32>
    %34 = arith.truncf %33 : vector<8x128xf32> to vector<8x128xbf16>
    %cst_20 = arith.constant dense<0.000000e+00> : vector<8x128xf32>
    %35 = tpu.matmul %34, %7, %cst_20 {dimension_numbers = #tpu.dot_dimension_numbers<[1], [0], [0], [1], [0, 0, 1, 1], [], []>} : vector<8x128xbf16>, vector<128x128xbf16>, vector<8x128xf32> -> vector<8x128xf32>
    %36 = vector.broadcast %10 : vector<1x128xf32> to vector<8x128xf32>
    %37 = arith.addf %35, %36 : vector<8x128xf32>
    %cst_21 = arith.constant dense<0xFF800000> : vector<8xf32>
    %38 = vector.multi_reduction <maximumf>, %37, %cst_21 [1] : vector<8x128xf32> to vector<8xf32>
    %39 = vector.shape_cast %38 : vector<8xf32> to vector<8x1xf32>
    %40 = vector.broadcast %39 : vector<8x1xf32> to vector<8x128xf32>
    %41 = arith.subf %37, %40 : vector<8x128xf32>
    %42 = math.exp %41 : vector<8x128xf32>
    %cst_22 = arith.constant dense<0.000000e+00> : vector<8xf32>
    %43 = vector.multi_reduction <add>, %42, %cst_22 [1] : vector<8x128xf32> to vector<8xf32>
    %44 = vector.shape_cast %43 : vector<8xf32> to vector<8x1xf32>
    %45 = tpu.reciprocal %44 {approx = true} : vector<8x1xf32> -> vector<8x1xf32>
    %46 = vector.broadcast %45 : vector<8x1xf32> to vector<8x128xf32>
    %47 = arith.mulf %42, %46 : vector<8x128xf32>
    %c0_23 = arith.constant 0 : index
    %c0_24 = arith.constant 0 : index
    %48 = vector.load %arg5[%c0_23, %c0_24] : memref<8x128xf32, #tpu.memory_space<vmem>>, vector<8x128xf32>
    tpu.vector_store %arg5[%c0_23, %c0_24], %47 {strides = array<i32>} : memref<8x128xf32, #tpu.memory_space<vmem>>, vector<8x128xf32>,
    return
  }
  func.func @transform_0(%arg0: i32) -> (i32, i32) {
    %c0_i32 = arith.constant 0 : i32
    %c0_i32_0 = arith.constant 0 : i32
    return %arg0, %c0_i32 : i32, i32
  }
  func.func @transform_1(%arg0: i32) -> (i32, i32) {
    %c0_i32 = arith.constant 0 : i32
    %c0_i32_0 = arith.constant 0 : i32
    return %arg0, %c0_i32 : i32, i32
  }
  func.func @transform_2(%arg0: i32) -> (i32, i32) {
    %c0_i32 = arith.constant 0 : i32
    %c0_i32_0 = arith.constant 0 : i32
    %c0_i32_1 = arith.constant 0 : i32
    return %c0_i32, %c0_i32_0 : i32, i32
  }
  func.func @transform_3(%arg0: i32) -> (i32, i32) {
    %c0_i32 = arith.constant 0 : i32
    %c0_i32_0 = arith.constant 0 : i32
    %c0_i32_1 = arith.constant 0 : i32
    return %c0_i32, %c0_i32_0 : i32, i32
  }
  func.func @transform_4(%arg0: i32) -> (i32, i32) {
    %c0_i32 = arith.constant 0 : i32
    %c0_i32_0 = arith.constant 0 : i32
    return %arg0, %c0_i32 : i32, i32
  }
}

</mosaic_0001>

<llo_original>
// kernel: predict_net_2_forward.1
$region0: #{predict_net_2_forward.1}
  #allocation0 [shape = 'u32[]', space=smem, size = 0x4, offset = 0x4, fixed_abs, tag = 'smem constant byte address 0x4 - core index']
  #allocation1 [shape = 'u32[144,128]{1,0:T(1,128)}', space=vmem, size = 0x12000, scoped, tag = 'internal scratch']
  %s0 = inlined_call_operand.hbm [shape: f32[8,16], index: 0, kind: input, shape index: {}]
  %s1 = inlined_call_operand.hbm [shape: f32[8,16], index: 1, kind: input, shape index: {}]
  %s2 = inlined_call_operand.hbm [shape: bf16[288,128], index: 2, kind: input, shape index: {}]
  %s3 = inlined_call_operand.vmem [shape: f32[3,128], index: 3, kind: input, shape index: {}]
  %s4 = inlined_call_operand.vmem [shape: f32[8,128], index: 4, kind: output, shape index: {}]
  %s5 = sld [smem:[#allocation0]]
  $region38: #{predict_net_2_forward.1} parent=0
    _
  %s7 = ssub.s32 1, %s5
  %s8 = scalar_select 0, %s7, %s5
  $region1: #{predict_net_2_forward.1} parent=0
    #allocation2 [shape = 'u8[4096]{0}', space=vmem, size = 0x1000, scoped, tag = 'input window, operand 0, single buffered']
    #allocation3 [shape = 's32[1]{0}', space=sflag, size = 0x4, scoped, tag = 'scoped memory for predict_net_2_forward.1']
    #allocation4 [shape = 'u8[4096]{0}', space=vmem, size = 0x1000, scoped, tag = 'input window, operand 1, single buffered']
    #allocation5 [shape = 's32[1]{0}', space=sflag, size = 0x4, scoped, tag = 'scoped memory for predict_net_2_forward.1']
    #allocation6 [shape = 'u8[73728]{0}', space=vmem, size = 0x12000, scoped, tag = 'input window, operand 2, single buffered']
    %9 = vsyncpa [#allocation3], 0
    %10 = vsyncpa [#allocation5], 0
    // Predicated region
    $region2: #{predict_net_2_forward.1} parent=1 // pred_check
      _
    $region3: #{predict_net_2_forward.1} parent=1 // pred_check_branch
      %12 = sbr.rel (0) target = $region5
    $region4: #{predict_net_2_forward.1} parent=1 // pred_region
      %s14 = ssub.s32 128, 128
      %15 = vsyncadd [#allocation3], %s14
      %s17 = sshll.u32 [#allocation2], 4
      %s18 = int_to_ptr.vmem [resolvable:$true] %s17
      %20 = dma.hbm_to_vmem [thread:$0]  %s0, 128, %s18, [#allocation3]
    $region5: #{predict_net_2_forward.1} parent=1 // pred_fallthru
      _
    // Predicated region
    $region6: #{predict_net_2_forward.1} parent=1 // pred_check
      _
    $region7: #{predict_net_2_forward.1} parent=1 // pred_check_branch
      %22 = sbr.rel (0) target = $region9
    $region8: #{predict_net_2_forward.1} parent=1 // pred_region
      %s24 = ssub.s32 128, 128
      %25 = vsyncadd [#allocation5], %s24
      %s27 = sshll.u32 [#allocation4], 4
      %s28 = int_to_ptr.vmem [resolvable:$true] %s27
      %30 = dma.hbm_to_vmem [thread:$0]  %s1, 128, %s28, [#allocation5]
    $region9: #{predict_net_2_forward.1} parent=1 // pred_fallthru
      _
    // Predicated region
    $region10: #{predict_net_2_forward.1} parent=1 // pred_check
      _
    $region11: #{predict_net_2_forward.1} parent=1 // pred_check_branch
      %32 = sbr.rel (0) target = $region13
    $region12: #{predict_net_2_forward.1} parent=1 // pred_region
      %s34 = ssub.s32 2304, 2304
      %35 = vsyncadd [#allocation5], %s34
      %s36 = sshll.u32 [#allocation6], 4
      %s37 = int_to_ptr.vmem [resolvable:$true] %s36
      %42 = dma.hbm_to_vmem [thread:$0]  %s2, 2304, %s37, [#allocation5], 64, 64, 4
    $region13: #{predict_net_2_forward.1} parent=1 // pred_fallthru
      _
    // Predicated region
    $region14: #{predict_net_2_forward.1} parent=1 // pred_check
      _
    $region15: #{predict_net_2_forward.1} parent=1 // pred_check_branch
      %44 = sbr.rel (0) target = $region17
    $region16: #{predict_net_2_forward.1} parent=1 // pred_region
      _
    $region17: #{predict_net_2_forward.1} parent=1 // pred_fallthru
      _
    // Predicated region
    $region18: #{predict_net_2_forward.1} parent=1 // pred_check
      _
    $region19: #{predict_net_2_forward.1} parent=1 // pred_check_branch
      %46 = sbr.rel (0) target = $region21
    $region20: #{predict_net_2_forward.1} parent=1 // pred_region
      %47 = dma.done [#allocation3], 128
    $region21: #{predict_net_2_forward.1} parent=1 // pred_fallthru
      _
    // Predicated region
    $region22: #{predict_net_2_forward.1} parent=1 // pred_check
      _
    $region23: #{predict_net_2_forward.1} parent=1 // pred_check_branch
      %49 = sbr.rel (0) target = $region25
    $region24: #{predict_net_2_forward.1} parent=1 // pred_region
      %50 = dma.done [#allocation5], 128
    $region25: #{predict_net_2_forward.1} parent=1 // pred_fallthru
      _
    // Predicated region
    $region26: #{predict_net_2_forward.1} parent=1 // pred_check
      _
    $region27: #{predict_net_2_forward.1} parent=1 // pred_check_branch
      %52 = sbr.rel (0) target = $region29
    $region28: #{predict_net_2_forward.1} parent=1 // pred_region
      %53 = dma.done [#allocation5], 2304
    $region29: #{predict_net_2_forward.1} parent=1 // pred_fallthru
      _
    %v55 = vld [vmem:[#allocation2] sm:$0xff]
    %v56 = vpack.c.bf16 %v55, %v55
    %v57 = vld [vmem:[#allocation4] sm:$0xff]
    %v58 = vpack.c.bf16 %v57, %v57
    %v59 = vld [vmem:[#allocation6] sm:$0xf]
    %v60 = vld [vmem:[#allocation6 + $0x4] sm:$0xf]
    %v61 = vld [vmem:[#allocation6 + $0x8] sm:$0xf]
    %v62 = vld [vmem:[#allocation6 + $0xc] sm:$0xf]
    %v63 = vld [vmem:[#allocation6 + $0x10] sm:$0xf]
    %v64 = vld [vmem:[#allocation6 + $0x14] sm:$0xf]
    %v65 = vld [vmem:[#allocation6 + $0x18] sm:$0xf]
    %v66 = vld [vmem:[#allocation6 + $0x1c] sm:$0xf]
    %v67 = vld [vmem:[#allocation6 + $0x20] sm:$0xf]
    %v68 = vld [vmem:[#allocation6 + $0x24] sm:$0xf]
    %v69 = vld [vmem:[#allocation6 + $0x28] sm:$0xf]
    %v70 = vld [vmem:[#allocation6 + $0x2c] sm:$0xf]
    %v71 = vld [vmem:[#allocation6 + $0x30] sm:$0xf]
    %v72 = vld [vmem:[#allocation6 + $0x34] sm:$0xf]
    %v73 = vld [vmem:[#allocation6 + $0x38] sm:$0xf]
    %v74 = vld [vmem:[#allocation6 + $0x3c] sm:$0xf]
    %v75 = vld [vmem:[#allocation6 + $0x40] sm:$0xf]
    %v76 = vld [vmem:[#allocation6 + $0x44] sm:$0xf]
    %v77 = vld [vmem:[#allocation6 + $0x48] sm:$0xf]
    %v78 = vld [vmem:[#allocation6 + $0x4c] sm:$0xf]
    %v79 = vld [vmem:[#allocation6 + $0x50] sm:$0xf]
    %v80 = vld [vmem:[#allocation6 + $0x54] sm:$0xf]
    %v81 = vld [vmem:[#allocation6 + $0x58] sm:$0xf]
    %v82 = vld [vmem:[#allocation6 + $0x5c] sm:$0xf]
    %v83 = vld [vmem:[#allocation6 + $0x60] sm:$0xf]
    %v84 = vld [vmem:[#allocation6 + $0x64] sm:$0xf]
    %v85 = vld [vmem:[#allocation6 + $0x68] sm:$0xf]
    %v86 = vld [vmem:[#allocation6 + $0x6c] sm:$0xf]
    %v87 = vld [vmem:[#allocation6 + $0x70] sm:$0xf]
    %v88 = vld [vmem:[#allocation6 + $0x74] sm:$0xf]
    %v89 = vld [vmem:[#allocation6 + $0x78] sm:$0xf]
    %v90 = vld [vmem:[#allocation6 + $0x7c] sm:$0xf]
    %v91 = vld [vmem:[#allocation6 + $0x80] sm:$0xf]
    %v92 = vld [vmem:[#allocation6 + $0x84] sm:$0xf]
    %v93 = vld [vmem:[#allocation6 + $0x88] sm:$0xf]
    %v94 = vld [vmem:[#allocation6 + $0x8c] sm:$0xf]
    %v95 = vld [vmem:[%s3] sm:$0x1]
    %v96 = vld [vmem:[%s3 + $0x1] sm:$0x1]
    %v97 = vld [vmem:[%s3 + $0x2] sm:$0x1]
    %v100 = vunpack.c.l.b16 %v61
    %v101 = vunpack.c.l.b16 %v62
    %v102 = vpack.c.b16 %v101, %v100
    %vm104 = vcmask 130048
    %v106 = vsel %vm104, %v58, 0
    %108 = vmatprep.subr.bf16.mxu0 0
    %109 = vmatpush1.bf16.msra.mxu0 %v102
    %110 = vmatprep.subr.bf16.mxu0 0
    %111 = vmatpush1.bf16.msra.mxu0 0
    %112 = vmatprep.subr.bf16.mxu0 0
    %113 = vmatpush1.bf16.msra.mxu0 0
    %114 = vmatprep.subr.bf16.mxu0 0
    %115 = vmatpush1.bf16.msra.mxu0 0
    %116 = vmatprep.subr.bf16.mxu0 0
    %117 = vmatpush1.bf16.msra.mxu0 0
    %118 = vmatprep.subr.bf16.mxu0 0
    %119 = vmatpush1.bf16.msra.mxu0 0
    %120 = vmatprep.subr.bf16.mxu0 0
    %121 = vmatpush1.bf16.msra.mxu0 0
    %122 = vmatprep.subr.bf16.mxu0 0
    %123 = vmatpush1.bf16.msra.mxu0 0
    %124 = vmatprep.subr.bf16.mxu0 0
    %125 = vmatpush1.bf16.msra.mxu0 0
    %126 = vmatprep.subr.bf16.mxu0 0
    %127 = vmatpush1.bf16.msra.mxu0 0
    %128 = vmatprep.subr.bf16.mxu0 0
    %129 = vmatpush1.bf16.msra.mxu0 0
    %130 = vmatprep.subr.bf16.mxu0 0
    %131 = vmatpush1.bf16.msra.mxu0 0
    %132 = vmatprep.subr.bf16.mxu0 0
    %133 = vmatpush1.bf16.msra.mxu0 0
    %134 = vmatprep.subr.bf16.mxu0 0
    %135 = vmatpush1.bf16.msra.mxu0 0
    %136 = vmatprep.subr.bf16.mxu0 0
    %137 = vmatpush1.bf16.msra.mxu0 0
    %138 = vmatprep.subr.bf16.mxu0 0
    %139 = vmatpush1.bf16.msra.mxu0 0
    %140 = vmatprep.mubr.bf16.mxu0 0
    %141 = vmatmul.mubr.bf16.gmra.mrb[0].mxu0 %v106
    %v142 = vpop.f32.mrb[0].mxu0
    %v143 = vadd.f32 0.0, %v142
    %v144 = vpop.f32.mrb[0].mxu0
    %v145 = vpop.f32.mrb[0].mxu0
    %v146 = vpop.f32.mrb[0].mxu0
    %147 = vdwg.mxu0
    %v150 = vunpack.c.l.b16 %v59
    %v151 = vunpack.c.l.b16 %v60
    %v152 = vpack.c.b16 %v151, %v150
    %v155 = vsel %vm104, %v56, 0
    %157 = vmatprep.subr.bf16.mxu0 0
    %158 = vmatpush1.bf16.msra.mxu0 %v152
    %159 = vmatprep.subr.bf16.mxu0 0
    %160 = vmatpush1.bf16.msra.mxu0 0
    %161 = vmatprep.subr.bf16.mxu0 0
    %162 = vmatpush1.bf16.msra.mxu0 0
    %163 = vmatprep.subr.bf16.mxu0 0
    %164 = vmatpush1.bf16.msra.mxu0 0
    %165 = vmatprep.subr.bf16.mxu0 0
    %166 = vmatpush1.bf16.msra.mxu0 0
    %167 = vmatprep.subr.bf16.mxu0 0
    %168 = vmatpush1.bf16.msra.mxu0 0
    %169 = vmatprep.subr.bf16.mxu0 0
    %170 = vmatpush1.bf16.msra.mxu0 0
    %171 = vmatprep.subr.bf16.mxu0 0
    %172 = vmatpush1.bf16.msra.mxu0 0
    %173 = vmatprep.subr.bf16.mxu0 0
    %174 = vmatpush1.bf16.msra.mxu0 0
    %175 = vmatprep.subr.bf16.mxu0 0
    %176 = vmatpush1.bf16.msra.mxu0 0
    %177 = vmatprep.subr.bf16.mxu0 0
    %178 = vmatpush1.bf16.msra.mxu0 0
    %179 = vmatprep.subr.bf16.mxu0 0
    %180 = vmatpush1.bf16.msra.mxu0 0
    %181 = vmatprep.subr.bf16.mxu0 0
    %182 = vmatpush1.bf16.msra.mxu0 0
    %183 = vmatprep.subr.bf16.mxu0 0
    %184 = vmatpush1.bf16.msra.mxu0 0
    %185 = vmatprep.subr.bf16.mxu0 0
    %186 = vmatpush1.bf16.msra.mxu0 0
    %187 = vmatprep.subr.bf16.mxu0 0
    %188 = vmatpush1.bf16.msra.mxu0 0
    %189 = vmatprep.mubr.bf16.mxu0 0
    %190 = vmatmul.mubr.bf16.gmra.mrb[0].mxu0 %v155
    %v191 = vpop.f32.mrb[0].mxu0
    %v192 = vadd.f32 %v143, %v191
    %v193 = vpop.f32.mrb[0].mxu0
    %v194 = vpop.f32.mrb[0].mxu0
    %v195 = vpop.f32.mrb[0].mxu0
    %196 = vdwg.mxu0
    %v197 = vlaneseq
    %v198 = vshrl.u32 %v197, 7
    %v199 = vsub.s32 0, %v198
    %v200 = vrot.slane %v95, %v199
    %v201 = vadd.f32 %v192, %v200
    %v202 = vmul.f32 %v201, 0.5
    %v203 = vtanh.pop %v202
    %v204 = vmul.f32 %v203, 0.5
    %v205 = vadd.f32 %v204, 0.5
    %v206 = vpack.c.bf16 %v205, %v205
    %v207 = vlaneseq
    %v208 = vshrl.u32 %v207, 7
    %v209 = vsub.s32 0, %v208
    %v210 = vrot.slane %v96, %v209
    %v227 = vunpack.c.l.b16 %v63
    %v228 = vunpack.c.l.b16 %v64
    %v229 = vunpack.c.l.b16 %v65
    %v230 = vunpack.c.l.b16 %v66
    %v231 = vunpack.c.l.b16 %v67
    %v232 = vunpack.c.l.b16 %v68
    %v233 = vunpack.c.l.b16 %v69
    %v234 = vunpack.c.l.b16 %v70
    %v235 = vunpack.c.l.b16 %v71
    %v236 = vunpack.c.l.b16 %v72
    %v237 = vunpack.c.l.b16 %v73
    %v238 = vunpack.c.l.b16 %v74
    %v239 = vunpack.c.l.b16 %v75
    %v240 = vunpack.c.l.b16 %v76
    %v241 = vunpack.c.l.b16 %v77
    %v242 = vunpack.c.l.b16 %v78
    %v243 = vpack.c.b16 %v228, %v227
    %v244 = vpack.c.b16 %v230, %v229
    %v245 = vpack.c.b16 %v232, %v231
    %v246 = vpack.c.b16 %v234, %v233
    %v247 = vpack.c.b16 %v236, %v235
    %v248 = vpack.c.b16 %v238, %v237
    %v249 = vpack.c.b16 %v240, %v239
    %v250 = vpack.c.b16 %v242, %v241
    %259 = vmatprep.subr.bf16.mxu0 0
    %260 = vmatpush1.bf16.msra.mxu0 %v243
    %261 = vmatprep.subr.bf16.mxu0 0
    %262 = vmatpush1.bf16.msra.mxu0 %v244
    %263 = vmatprep.subr.bf16.mxu0 0
    %264 = vmatpush1.bf16.msra.mxu0 %v245
    %265 = vmatprep.subr.bf16.mxu0 0
    %266 = vmatpush1.bf16.msra.mxu0 %v246
    %267 = vmatprep.subr.bf16.mxu0 0
    %268 = vmatpush1.bf16.msra.mxu0 %v247
    %269 = vmatprep.subr.bf16.mxu0 0
    %270 = vmatpush1.bf16.msra.mxu0 %v248
    %271 = vmatprep.subr.bf16.mxu0 0
    %272 = vmatpush1.bf16.msra.mxu0 %v249
    %273 = vmatprep.subr.bf16.mxu0 0
    %274 = vmatpush1.bf16.msra.mxu0 %v250
    %275 = vmatprep.subr.bf16.mxu0 0
    %276 = vmatpush1.bf16.msra.mxu0 0
    %277 = vmatprep.subr.bf16.mxu0 0
    %278 = vmatpush1.bf16.msra.mxu0 0
    %279 = vmatprep.subr.bf16.mxu0 0
    %280 = vmatpush1.bf16.msra.mxu0 0
    %281 = vmatprep.subr.bf16.mxu0 0
    %282 = vmatpush1.bf16.msra.mxu0 0
    %283 = vmatprep.subr.bf16.mxu0 0
    %284 = vmatpush1.bf16.msra.mxu0 0
    %285 = vmatprep.subr.bf16.mxu0 0
    %286 = vmatpush1.bf16.msra.mxu0 0
    %287 = vmatprep.subr.bf16.mxu0 0
    %288 = vmatpush1.bf16.msra.mxu0 0
    %289 = vmatprep.subr.bf16.mxu0 0
    %290 = vmatpush1.bf16.msra.mxu0 0
    %291 = vmatprep.mubr.bf16.mxu0 0
    %292 = vmatmul.mubr.bf16.gmra.mrb[0].mxu0 %v206
    %v293 = vpop.f32.mrb[0].mxu0
    %v294 = vadd.f32 %v210, %v293
    %v295 = vpop.f32.mrb[0].mxu0
    %v296 = vpop.f32.mrb[0].mxu0
    %v297 = vpop.f32.mrb[0].mxu0
    %298 = vdwg.mxu0
    %v299 = vmul.f32 %v294, 0.5
    %v300 = vtanh.pop %v299
    %v301 = vmul.f32 %v300, 0.5
    %v302 = vadd.f32 %v301, 0.5
    %v303 = vpack.c.bf16 %v302, %v302
    %v304 = vlaneseq
    %v305 = vshrl.u32 %v304, 7
    %v306 = vsub.s32 0, %v305
    %v307 = vrot.slane %v97, %v306
    %v324 = vunpack.c.l.b16 %v79
    %v325 = vunpack.c.l.b16 %v80
    %v326 = vunpack.c.l.b16 %v81
    %v327 = vunpack.c.l.b16 %v82
    %v328 = vunpack.c.l.b16 %v83
    %v329 = vunpack.c.l.b16 %v84
    %v330 = vunpack.c.l.b16 %v85
    %v331 = vunpack.c.l.b16 %v86
    %v332 = vunpack.c.l.b16 %v87
    %v333 = vunpack.c.l.b16 %v88
    %v334 = vunpack.c.l.b16 %v89
    %v335 = vunpack.c.l.b16 %v90
    %v336 = vunpack.c.l.b16 %v91
    %v337 = vunpack.c.l.b16 %v92
    %v338 = vunpack.c.l.b16 %v93
    %v339 = vunpack.c.l.b16 %v94
    %v340 = vpack.c.b16 %v325, %v324
    %v341 = vpack.c.b16 %v327, %v326
    %v342 = vpack.c.b16 %v329, %v328
    %v343 = vpack.c.b16 %v331, %v330
    %v344 = vpack.c.b16 %v333, %v332
    %v345 = vpack.c.b16 %v335, %v334
    %v346 = vpack.c.b16 %v337, %v336
    %v347 = vpack.c.b16 %v339, %v338
    %356 = vmatprep.subr.bf16.mxu0 0
    %357 = vmatpush1.bf16.msra.mxu0 %v340
    %358 = vmatprep.subr.bf16.mxu0 0
    %359 = vmatpush1.bf16.msra.mxu0 %v341
    %360 = vmatprep.subr.bf16.mxu0 0
    %361 = vmatpush1.bf16.msra.mxu0 %v342
    %362 = vmatprep.subr.bf16.mxu0 0
    %363 = vmatpush1.bf16.msra.mxu0 %v343
    %364 = vmatprep.subr.bf16.mxu0 0
    %365 = vmatpush1.bf16.msra.mxu0 %v344
    %366 = vmatprep.subr.bf16.mxu0 0
    %367 = vmatpush1.bf16.msra.mxu0 %v345
    %368 = vmatprep.subr.bf16.mxu0 0
    %369 = vmatpush1.bf16.msra.mxu0 %v346
    %370 = vmatprep.subr.bf16.mxu0 0
    %371 = vmatpush1.bf16.msra.mxu0 %v347
    %372 = vmatprep.subr.bf16.mxu0 0
    %373 = vmatpush1.bf16.msra.mxu0 0
    %374 = vmatprep.subr.bf16.mxu0 0
    %375 = vmatpush1.bf16.msra.mxu0 0
    %376 = vmatprep.subr.bf16.mxu0 0
    %377 = vmatpush1.bf16.msra.mxu0 0
    %378 = vmatprep.subr.bf16.mxu0 0
    %379 = vmatpush1.bf16.msra.mxu0 0
    %380 = vmatprep.subr.bf16.mxu0 0
    %381 = vmatpush1.bf16.msra.mxu0 0
    %382 = vmatprep.subr.bf16.mxu0 0
    %383 = vmatpush1.bf16.msra.mxu0 0
    %384 = vmatprep.subr.bf16.mxu0 0
    %385 = vmatpush1.bf16.msra.mxu0 0
    %386 = vmatprep.subr.bf16.mxu0 0
    %387 = vmatpush1.bf16.msra.mxu0 0
    %388 = vmatprep.mubr.bf16.mxu0 0
    %389 = vmatmul.mubr.bf16.gmra.mrb[0].mxu0 %v303
    %v390 = vpop.f32.mrb[0].mxu0
    %v391 = vadd.f32 %v307, %v390
    %v392 = vpop.f32.mrb[0].mxu0
    %v393 = vpop.f32.mrb[0].mxu0
    %v394 = vpop.f32.mrb[0].mxu0
    %395 = vdwg.mxu0
    %396 = vmax.xlane.f32.xlu0 %v391
    %v397 = vpop.xlane.xlu0 %396
    %v398 = vsub.f32 %v391, %v397
    %v399 = vmul.f32 %v398, 1.442695
    %v400 = vpow.pop %v399
    %401 = vadd.xlane.f32.xlu0 %v400
    %v402 = vpop.xlane.xlu0 %401
    %v403 = vrcp.pop %v402
    %v404 = vmul.f32 %v400, %v403
    %405 = vst [vmem:[%s4] sm:$0xff] %v404
    // Predicated region
    $region30: #{predict_net_2_forward.1} parent=1 // pred_check
      _
    $region31: #{predict_net_2_forward.1} parent=1 // pred_check_branch
      %407 = sbr.rel (0) target = $region33
    $region32: #{predict_net_2_forward.1} parent=1 // pred_region
      _
    $region33: #{predict_net_2_forward.1} parent=1 // pred_fallthru
      _
    // Predicated region
    $region34: #{predict_net_2_forward.1} parent=1 // pred_check
      _
    $region35: #{predict_net_2_forward.1} parent=1 // pred_check_branch
      %409 = sbr.rel (0) target = $region37
    $region36: #{predict_net_2_forward.1} parent=1 // pred_region
      _
    $region37: #{predict_net_2_forward.1} parent=1 // pred_fallthru
      _
    %410 = vsyncpa [#allocation3], 1
    %411 = vsyncpa [#allocation5], 1

</llo_original>
